<compile_context>
chip_gen: v7x
topology: tpu7x:2x2x1
jax: 0.10.0
libtpu: 0.0.40
codegen_flags: <defaults>
</compile_context>

<pallas_src>
import functools

import jax
import jax.numpy as jnp
from jax.experimental import pallas as pl
from jax.experimental.pallas import tpu as pltpu


def _flrelu_bias_kernel(x_ref, b_ref, o_ref, *, negative_slope, scale):
    # x_ref: (TR, TC) tile; b_ref: (TR, 1) column OR (1, TC) row -> broadcasts.
    x = x_ref[...] + b_ref[...]
    # Fold select + both multiplies: one vcmp + one vsel + one vmul per element.
    gain = jnp.where(x >= 0, scale, negative_slope * scale).astype(x.dtype)
    o_ref[...] = (x * gain).astype(o_ref.dtype)


def _flrelu_nobias_kernel(x_ref, o_ref, *, negative_slope, scale):
    x = x_ref[...]
    gain = jnp.where(x >= 0, scale, negative_slope * scale).astype(x.dtype)
    o_ref[...] = (x * gain).astype(o_ref.dtype)


def _choose_tiles(rows, lanes, itemsize, target_block_bytes):
    """~target_block_bytes tiles; rows %8, lanes %128 (or full extent)."""
    if lanes > 128 and lanes * 8 * itemsize > target_block_bytes:
        tile_cols = max(128, (target_block_bytes // (8 * itemsize)) // 128 * 128)
        tile_cols = min(tile_cols, lanes)
    else:
        tile_cols = lanes
    tile_rows = target_block_bytes // max(tile_cols * itemsize, 1)
    tile_rows = max(8, (tile_rows // 8) * 8)
    if tile_rows >= rows:
        tile_rows = rows  # full extent is always legal
    return tile_rows, tile_cols


def fused_leaky_relu(x, bias=None, negative_slope=0.2, scale=2 ** 0.5,
                     target_block_bytes=2 * 1024 * 1024):
    """Matches torch fused_leaky_relu forward: (N, C, *spatial) + per-channel bias."""
    orig_shape = x.shape
    dtype = x.dtype
    itemsize = jnp.dtype(dtype).itemsize
    ns = float(negative_slope)
    sc = float(scale)

    if x.ndim < 2:
        if bias is not None:
            raise ValueError("bias requires input with ndim >= 2 (channel dim 1)")
        x2d = x.reshape(1, max(int(x.size), 1))
        rows, lanes = x2d.shape
        bias_mode = None
    elif x.ndim == 2:
        # (N, C): channel is already the lane dim -> bias is a (1, C) row.
        rows, lanes = int(orig_shape[0]), int(orig_shape[1])
        x2d = x.reshape(rows, lanes)
        bias_mode = "row" if bias is not None else None
    else:
        # (N, C, *spatial): free reshape to (N*C, prod(spatial)); bias per row.
        N, C = int(orig_shape[0]), int(orig_shape[1])
        lanes = 1
        for d in orig_shape[2:]:
            lanes *= int(d)
        lanes = max(lanes, 1)
        rows = N * C
        x2d = x.reshape(rows, lanes)
        bias_mode = "col" if bias is not None else None

    tile_rows, tile_cols = _choose_tiles(rows, lanes, itemsize, target_block_bytes)
    grid = (pl.cdiv(rows, tile_rows), pl.cdiv(lanes, tile_cols))

    x_spec = pl.BlockSpec((tile_rows, tile_cols), lambda i, j: (i, j))
    out_spec = pl.BlockSpec((tile_rows, tile_cols), lambda i, j: (i, j))

    if bias_mode is None:
        kernel = functools.partial(_flrelu_nobias_kernel,
                                   negative_slope=ns, scale=sc)
        in_specs = [x_spec]
        operands = (x2d,)
    elif bias_mode == "col":
        # Row r of the slab is channel r % C -> tiny (N*C, 1) column.
        N, C = int(orig_shape[0]), int(orig_shape[1])
        b_arr = jnp.broadcast_to(bias.astype(dtype).reshape(1, C),
                                 (N, C)).reshape(rows, 1)
        # Bias block only depends on i -> not re-DMA'd across lane blocks.
        b_spec = pl.BlockSpec((tile_rows, 1), lambda i, j: (i, 0))
        kernel = functools.partial(_flrelu_bias_kernel,
                                   negative_slope=ns, scale=sc)
        in_specs = [x_spec, b_spec]
        operands = (x2d, b_arr)
    else:  # "row": 2-D input, bias along the lane axis.
        b_arr = bias.astype(dtype).reshape(1, lanes)
        b_spec = pl.BlockSpec((1, tile_cols), lambda i, j: (0, j))
        kernel = functools.partial(_flrelu_bias_kernel,
                                   negative_slope=ns, scale=sc)
        in_specs = [x_spec, b_spec]
        operands = (x2d, b_arr)

    out2d = pl.pallas_call(
        kernel,
        out_shape=jax.ShapeDtypeStruct((rows, lanes), dtype),
        grid_spec=pltpu.PrefetchScalarGridSpec(
            num_scalar_prefetch=0,
            grid=grid,
            in_specs=in_specs,
            out_specs=out_spec,
        ),
        compiler_params=pltpu.CompilerParams(
            dimension_semantics=("parallel", "parallel")),
    )(*operands)

    return out2d.reshape(orig_shape)


class FusedLeakyReLU:
    """JAX mirror of the PyTorch FusedLeakyReLU module (forward only)."""

    def __init__(self, channel, bias=True, negative_slope=0.2, scale=2 ** 0.5):
        # nn.Parameter(torch.zeros(channel)) -> deterministic zero init
        self.bias = jnp.zeros((channel,), dtype=jnp.float32) if bias else None
        self.negative_slope = negative_slope
        self.scale = scale

    def __call__(self, x):
        return fused_leaky_relu(x, self.bias, self.negative_slope, self.scale)


if __name__ == "__main__":
    key = jax.random.PRNGKey(0)
    N, C, H, W = 2, 4, 16, 16
    kx, kb, k2 = jax.random.split(key, 3)
    x = jax.random.normal(kx, (N, C, H, W), dtype=jnp.float32)

    mod = FusedLeakyReLU(channel=C, bias=True)
    # give the bias a non-trivial deterministic value so the add is exercised
    mod.bias = jax.random.normal(kb, (C,), dtype=jnp.float32)

    out = mod(x)
    jax.block_until_ready(out)

    # reference check (plain JAX)
    xb = x + mod.bias.reshape(1, C, 1, 1)
    ref = jnp.where(xb >= 0, xb, xb * 0.2) * (2 ** 0.5)
    assert out.shape == (N, C, H, W)
    assert jnp.allclose(out, ref, atol=1e-5, rtol=1e-5)

    # bias=None path
    out_nb = fused_leaky_relu(x, None)
    ref_nb = jnp.where(x >= 0, x, x * 0.2) * (2 ** 0.5)
    assert jnp.allclose(out_nb, ref_nb, atol=1e-5, rtol=1e-5)

    # 2-D (post-linear) path: bias broadcasts along the channel (last) dim
    x2 = jax.random.normal(k2, (8, 32), dtype=jnp.float32)
    b2 = jnp.arange(32, dtype=jnp.float32) * 0.01
    out2 = fused_leaky_relu(x2, b2)
    jax.block_until_ready(out2)
    x2b = x2 + b2.reshape(1, 32)
    ref2 = jnp.where(x2b >= 0, x2b, x2b * 0.2) * (2 ** 0.5)
    assert jnp.allclose(out2, ref2, atol=1e-5, rtol=1e-5)

    print("KERNEL_OK")
</pallas_src>

<mosaic_0001>
module attributes {stable_mosaic.version = 11 : i64} {
  func.func @_flrelu_bias_kernel(%arg0: i32, %arg1: i32, %arg2: memref<8x256xf32, #tpu.memory_space<vmem>>, %arg3: memref<8x1xf32, #tpu.memory_space<vmem>>, %arg4: memref<8x256xf32, #tpu.memory_space<vmem>>) attributes {dimension_semantics = [#tpu.dimension_semantics<parallel>, #tpu.dimension_semantics<parallel>], iteration_bounds = array<i64: 1, 1>, scalar_prefetch = 0 : i64, scratch_operands = 0 : i64, tpu.core_type = #tpu.core_type<tc>, window_params = [{transform_indices = @transform_0, window_bounds = array<i64: 8, 256>}, {transform_indices = @transform_1, window_bounds = array<i64: 8, 1>}, {transform_indices = @transform_2, window_bounds = array<i64: 8, 256>}]} {
    %c0 = arith.constant 0 : index
    %c0_0 = arith.constant 0 : index
    %0 = vector.load %arg2[%c0, %c0_0] : memref<8x256xf32, #tpu.memory_space<vmem>>, vector<8x256xf32>
    %c0_1 = arith.constant 0 : index
    %c0_2 = arith.constant 0 : index
    %1 = vector.load %arg3[%c0_1, %c0_2] : memref<8x1xf32, #tpu.memory_space<vmem>>, vector<8x1xf32>
    %2 = vector.broadcast %1 : vector<8x1xf32> to vector<8x256xf32>
    %3 = arith.addf %0, %2 : vector<8x256xf32>
    %cst = arith.constant 0.000000e+00 : f32
    %4 = vector.broadcast %cst : f32 to vector<8x256xf32>
    %5 = arith.cmpf oge, %3, %4 : vector<8x256xf32>
    %cst_3 = arith.constant 1.41421354 : f32
    %cst_4 = arith.constant 0.282842726 : f32
    %6 = vector.broadcast %cst_3 : f32 to vector<8x256xf32>
    %7 = vector.broadcast %cst_4 : f32 to vector<8x256xf32>
    %8 = arith.select %5, %6, %7 : vector<8x256xi1>, vector<8x256xf32>
    %9 = arith.mulf %3, %8 : vector<8x256xf32>
    %c0_5 = arith.constant 0 : index
    %c0_6 = arith.constant 0 : index
    %10 = vector.load %arg4[%c0_5, %c0_6] : memref<8x256xf32, #tpu.memory_space<vmem>>, vector<8x256xf32>
    tpu.vector_store %arg4[%c0_5, %c0_6], %9 {strides = array<i32>} : memref<8x256xf32, #tpu.memory_space<vmem>>, vector<8x256xf32>,
    return
  }
  func.func @transform_0(%arg0: i32, %arg1: i32) -> (i32, i32) {
    %c0_i32 = arith.constant 0 : i32
    return %arg0, %arg1 : i32, i32
  }
  func.func @transform_1(%arg0: i32, %arg1: i32) -> (i32, i32) {
    %c0_i32 = arith.constant 0 : i32
    %c0_i32_0 = arith.constant 0 : i32
    return %arg0, %c0_i32 : i32, i32
  }
  func.func @transform_2(%arg0: i32, %arg1: i32) -> (i32, i32) {
    %c0_i32 = arith.constant 0 : i32
    return %arg0, %arg1 : i32, i32
  }
}

</mosaic_0001>

<llo_original>
// kernel: tpu_custom_call.1
$region0: #{tpu_custom_call.1}
  #allocation0 [shape = 'u32[]', space=smem, size = 0x4, offset = 0x4, fixed_abs, tag = 'smem constant byte address 0x4 - core index']
  #allocation1 [shape = 'u32[144,128]{1,0:T(1,128)}', space=vmem, size = 0x12000, scoped, tag = 'internal scratch']
  %s0 = inlined_call_operand.hbm [shape: f32[8,256], index: 0, kind: input, shape index: {}]
  %s1 = inlined_call_operand.vmem [shape: f32[8,1], index: 1, kind: input, shape index: {}]
  %s2 = inlined_call_operand.hbm [shape: f32[8,256], index: 2, kind: output, shape index: {}]
  %s3 = sld [smem:[#allocation0]]
  $region22: #{tpu_custom_call.1} parent=0
    _
  %s5 = ssub.s32 1, %s3
  %s6 = scalar_select 0, %s5, %s3
  $region1: #{tpu_custom_call.1} parent=0
    #allocation2 [shape = 'u8[8192]{0}', space=vmem, size = 0x2000, scoped, tag = 'input window, operand 0, single buffered']
    #allocation3 [shape = 's32[1]{0}', space=sflag, size = 0x4, scoped, tag = 'scoped memory for tpu_custom_call.1']
    #allocation4 [shape = 's32[1]{0}', space=sflag, size = 0x4, scoped, tag = 'scoped memory for tpu_custom_call.1']
    #allocation5 [shape = 'u8[8192]{0}', space=vmem, size = 0x2000, scoped, tag = 'output window, operand 0, single buffered']
    %7 = vsyncpa [#allocation3], 0
    %8 = vsyncpa [#allocation4], 0
    // Predicated region
    $region2: #{tpu_custom_call.1} parent=1 // pred_check
      _
    $region3: #{tpu_custom_call.1} parent=1 // pred_check_branch
      %10 = sbr.rel (0) target = $region5
    $region4: #{tpu_custom_call.1} parent=1 // pred_region
      %s12 = ssub.s32 256, 256
      %13 = vsyncadd [#allocation3], %s12
      %s15 = sshll.u32 [#allocation2], 4
      %s16 = int_to_ptr.vmem [resolvable:$true] %s15
      %18 = dma.hbm_to_vmem [thread:$0]  %s0, 256, %s16, [#allocation3]
    $region5: #{tpu_custom_call.1} parent=1 // pred_fallthru
      _
    // Predicated region
    $region6: #{tpu_custom_call.1} parent=1 // pred_check
      _
    $region7: #{tpu_custom_call.1} parent=1 // pred_check_branch
      %20 = sbr.rel (0) target = $region9
    $region8: #{tpu_custom_call.1} parent=1 // pred_region
      _
    $region9: #{tpu_custom_call.1} parent=1 // pred_fallthru
      _
    // Predicated region
    $region10: #{tpu_custom_call.1} parent=1 // pred_check
      _
    $region11: #{tpu_custom_call.1} parent=1 // pred_check_branch
      %22 = sbr.rel (0) target = $region13
    $region12: #{tpu_custom_call.1} parent=1 // pred_region
      %23 = dma.done [#allocation3], 256
    $region13: #{tpu_custom_call.1} parent=1 // pred_fallthru
      _
    %v24 = vld [vmem:[#allocation2] sm:$0xff]
    %v25 = vld [vmem:[#allocation2 + $0x8] sm:$0xff]
    %v26 = vld [vmem:[%s1] sm:$0xff]
    %28 = vset.pattern.permute.xlu0 0
    %29 = vperm.xlu0 %28, %v26
    %v30 = vpop.permute.xlu0 %29
    %v32 = vadd.f32 %v24, %v30
    %v33 = vadd.f32 %v25, %v30
    %vm34 = vcmp.ge.f32.partialorder %v32, 0.0
    %vm35 = vcmp.ge.f32.partialorder %v33, 0.0
    %v36 = vsel %vm34, 1.4142135, 0.28284273
    %v37 = vsel %vm35, 1.4142135, 0.28284273
    %v38 = vmul.f32 %v32, %v36
    %v39 = vmul.f32 %v33, %v37
    %40 = vst [vmem:[#allocation5] sm:$0xff] %v38
    %41 = vst [vmem:[#allocation5 + $0x8] sm:$0xff] %v39
    // Predicated region
    $region14: #{tpu_custom_call.1} parent=1 // pred_check
      _
    $region15: #{tpu_custom_call.1} parent=1 // pred_check_branch
      %43 = sbr.rel (0) target = $region17
    $region16: #{tpu_custom_call.1} parent=1 // pred_region
      %s45 = ssub.s32 256, 256
      %46 = vsyncadd [#allocation4], %s45
      %s48 = sshll.u32 [#allocation5], 4
      %s49 = int_to_ptr.vmem [resolvable:$true] %s48
      %51 = dma.vmem_to_hbm [thread:$0]  %s49, 256, %s2, [#allocation4]
    $region17: #{tpu_custom_call.1} parent=1 // pred_fallthru
      _
    // Predicated region
    $region18: #{tpu_custom_call.1} parent=1 // pred_check
      _
    $region19: #{tpu_custom_call.1} parent=1 // pred_check_branch
      %53 = sbr.rel (0) target = $region21
    $region20: #{tpu_custom_call.1} parent=1 // pred_region
      %54 = dma.done [#allocation4], 256
    $region21: #{tpu_custom_call.1} parent=1 // pred_fallthru
      _
    %55 = vsyncpa [#allocation3], 1
    %56 = vsyncpa [#allocation4], 1

</llo_original>
